<compile_context>
chip_gen: v5e
topology: v5e:2x2
jax: 0.10.0
libtpu: 0.0.40
codegen_flags: <defaults>
</compile_context>

<pallas_src>
import math

import jax
import jax.numpy as jnp
from jax.experimental import pallas as pl
from jax.experimental.pallas import tpu as pltpu


def _round_up(x, m):
    return ((x + m - 1) // m) * m


def _pick_hidden_tile(dp, cap=512):
    """Largest multiple of 128 that divides dp and is <= cap."""
    best = 128
    t = 128
    while t <= min(cap, dp):
        if dp % t == 0:
            best = t
        t += 128
    return best


def ffn_kernel_single(x_ref, w1_ref, b1_ref, w2_ref, b2_ref, o_ref):
    """Single-pass FFN: whole hidden dim resident. grid = (row_tiles,)."""
    h = jnp.dot(x_ref[...], w1_ref[...], preferred_element_type=jnp.float32)
    h = jnp.maximum(h + b1_ref[...], 0.0)
    y = jnp.dot(h.astype(w2_ref.dtype), w2_ref[...],
                preferred_element_type=jnp.float32)
    o_ref[...] = (y + b2_ref[...]).astype(o_ref.dtype)


def ffn_kernel_tiled(x_ref, w1_ref, b1_ref, w2_ref, b2_ref, o_ref, acc_ref):
    """Hidden-dim tiled FFN. grid = (row_tiles, hidden_tiles); k is reduction."""
    k = pl.program_id(1)

    @pl.when(k == 0)
    def _():
        acc_ref[...] = jnp.zeros_like(acc_ref)

    # layer1 chunk: [rt, Dp] @ [Dp, th] -> [rt, th], f32 MXU accumulation.
    h = jnp.dot(x_ref[...], w1_ref[...], preferred_element_type=jnp.float32)
    h = jnp.maximum(h + b1_ref[...], 0.0)

    # layer2 partial product: [rt, th] @ [th, Dp] accumulated into f32 scratch.
    acc_ref[...] += jnp.dot(h.astype(w2_ref.dtype), w2_ref[...],
                            preferred_element_type=jnp.float32)

    @pl.when(k == pl.num_programs(1) - 1)
    def _():
        o_ref[...] = (acc_ref[...] + b2_ref[...]).astype(o_ref.dtype)


def feed_forward_block(x, w1, b1, w2, b2, *, row_tile=None, hidden_tile=None):
    """x: [M, D]; w1, w2: [D, D] ([in, out]); b1, b2: [1, D]."""
    M, D = x.shape

    # Pad lane dim to a multiple of 128 (lane-dense MXU / unmasked stores) and
    # rows to the chosen tile (multiple of 8).  Zero padding preserves the math
    # for the kept rows/lanes; padded rows/lanes are sliced off at the end.
    dp = max(128, _round_up(D, 128))
    if row_tile is None:
        row_tile = 256                      # feeds the 256x256 MXU on v6e/v7x
    row_tile = min(_round_up(row_tile, 8), _round_up(M, 8))
    mp = _round_up(M, row_tile)
    if hidden_tile is None:
        hidden_tile = _pick_hidden_tile(dp)

    xp = jnp.pad(x, ((0, mp - M), (0, dp - D)))
    w1p = jnp.pad(w1, ((0, dp - D), (0, dp - D)))
    b1p = jnp.pad(b1, ((0, 0), (0, dp - D)))
    w2p = jnp.pad(w2, ((0, dp - D), (0, dp - D)))
    b2p = jnp.pad(b2, ((0, 0), (0, dp - D)))

    elt = x.dtype.itemsize
    w_bytes = w1p.size * w1p.dtype.itemsize + w2p.size * w2p.dtype.itemsize
    n_row_tiles = mp // row_tile
    cost = pl.CostEstimate(
        flops=4 * mp * dp * dp,             # two matmuls: 2 * 2*M*D*D
        transcendentals=0,
        bytes_accessed=(xp.size * elt
                        + n_row_tiles * w_bytes  # weights re-streamed per row tile
                        + mp * dp * elt),
    )
    vmem_limit = 64 * 1024 * 1024

    # Fast path: whole hidden dim resident if the working set is small enough
    # (x tile + double-buffered W1/W2 + out, with headroom under vmem_limit).
    wset = (2 * row_tile * dp * elt          # x tile + out tile
            + 2 * 2 * dp * dp * elt          # W1, W2 double-buffered
            + 2 * dp * elt)                  # biases
    if wset <= vmem_limit // 2:
        out = pl.pallas_call(
            ffn_kernel_single,
            out_shape=jax.ShapeDtypeStruct((mp, dp), x.dtype),
            grid_spec=pltpu.PrefetchScalarGridSpec(
                num_scalar_prefetch=0,
                grid=(n_row_tiles,),
                in_specs=[
                    pl.BlockSpec((row_tile, dp), lambda i: (i, 0)),  # x rows
                    pl.BlockSpec((dp, dp), lambda i: (0, 0)),        # W1
                    pl.BlockSpec((1, dp), lambda i: (0, 0)),         # b1
                    pl.BlockSpec((dp, dp), lambda i: (0, 0)),        # W2
                    pl.BlockSpec((1, dp), lambda i: (0, 0)),         # b2
                ],
                out_specs=pl.BlockSpec((row_tile, dp), lambda i: (i, 0)),
            ),
            compiler_params=pltpu.CompilerParams(
                dimension_semantics=("parallel",),
                vmem_limit_bytes=vmem_limit,
            ),
            cost_estimate=cost,
        )(xp, w1p, b1p, w2p, b2p)
        return out[:M, :D]

    # General path: tile the hidden (reduction) dim; row axis "parallel",
    # hidden axis "arbitrary" and last in the grid.
    grid = (n_row_tiles, dp // hidden_tile)
    out = pl.pallas_call(
        ffn_kernel_tiled,
        out_shape=jax.ShapeDtypeStruct((mp, dp), x.dtype),
        grid_spec=pltpu.PrefetchScalarGridSpec(
            num_scalar_prefetch=0,
            grid=grid,
            in_specs=[
                pl.BlockSpec((row_tile, dp), lambda i, k: (i, 0)),     # x rows (resident over k)
                pl.BlockSpec((dp, hidden_tile), lambda i, k: (0, k)),  # W1 hidden-dim chunk
                pl.BlockSpec((1, hidden_tile), lambda i, k: (0, k)),   # b1 chunk
                pl.BlockSpec((hidden_tile, dp), lambda i, k: (k, 0)),  # W2 hidden-dim chunk
                pl.BlockSpec((1, dp), lambda i, k: (0, 0)),            # b2
            ],
            out_specs=pl.BlockSpec((row_tile, dp), lambda i, k: (i, 0)),
            scratch_shapes=[pltpu.VMEM((row_tile, dp), jnp.float32)],  # f32 accumulator
        ),
        compiler_params=pltpu.CompilerParams(
            dimension_semantics=("parallel", "arbitrary"),
            vmem_limit_bytes=vmem_limit,
        ),
        cost_estimate=cost,
    )(xp, w1p, b1p, w2p, b2p)
    return out[:M, :D]


def init_params(key, dim_ff, dtype=jnp.float32):
    # PyTorch nn.Linear default init: U(-1/sqrt(fan_in), 1/sqrt(fan_in))
    bound = 1.0 / math.sqrt(dim_ff)
    k1, k2, k3, k4 = jax.random.split(key, 4)
    w1 = jax.random.uniform(k1, (dim_ff, dim_ff), dtype, -bound, bound)  # [in, out]
    b1 = jax.random.uniform(k2, (1, dim_ff), dtype, -bound, bound)
    w2 = jax.random.uniform(k3, (dim_ff, dim_ff), dtype, -bound, bound)  # [in, out]
    b2 = jax.random.uniform(k4, (1, dim_ff), dtype, -bound, bound)
    return w1, b1, w2, b2


if __name__ == "__main__":
    batch, seq, dim_ff = 2, 8, 32
    key = jax.random.PRNGKey(0)
    kx, kp = jax.random.split(key)

    ffn_in = jax.random.normal(kx, (batch, seq, dim_ff), jnp.float32)
    w1, b1, w2, b2 = init_params(kp, dim_ff, dtype=jnp.float32)

    # Glue: flatten leading dims to rows, run the fused Pallas FFN, reshape back.
    x2d = ffn_in.reshape(batch * seq, dim_ff)

    # Pure-JAX reference (same semantics as the PyTorch module).
    ref = jnp.maximum(x2d @ w1 + b1, 0.0) @ w2 + b2

    # --- f32 path (small dp -> single-pass kernel): tight check --------------
    out_f32 = feed_forward_block(x2d, w1, b1, w2, b2)
    jax.block_until_ready(out_f32)
    assert out_f32.shape == (batch * seq, dim_ff)
    assert jnp.allclose(out_f32, ref, atol=1e-5, rtol=1e-5)

    # --- exercise the tiled (reduction) path on the same small problem ------
    out_tiled = feed_forward_block(x2d, w1, b1, w2, b2,
                                   row_tile=16, hidden_tile=128)
    jax.block_until_ready(out_tiled)
    assert jnp.allclose(out_tiled, ref, atol=1e-5, rtol=1e-5)

    # --- bf16 path (recommended production config: bf16 operands, f32 acc) --
    to_bf16 = lambda a: a.astype(jnp.bfloat16)
    out_bf16 = feed_forward_block(to_bf16(x2d), to_bf16(w1), to_bf16(b1),
                                  to_bf16(w2), to_bf16(b2))
    jax.block_until_ready(out_bf16)
    # bf16 operands vs an f32 reference -> looser tolerance (expected precision behavior).
    assert jnp.allclose(out_bf16.astype(jnp.float32), ref, atol=1e-1, rtol=1e-1)

    out = out_f32.reshape(batch, seq, dim_ff)
    jax.block_until_ready(out)
    print("KERNEL_OK")
</pallas_src>

<mosaic_0001>
module attributes {stable_mosaic.version = 11 : i64} {
  func.func @ffn_kernel_single(%arg0: i32, %arg1: memref<16x128xf32, #tpu.memory_space<vmem>>, %arg2: memref<128x128xf32, #tpu.memory_space<vmem>>, %arg3: memref<1x128xf32, #tpu.memory_space<vmem>>, %arg4: memref<128x128xf32, #tpu.memory_space<vmem>>, %arg5: memref<1x128xf32, #tpu.memory_space<vmem>>, %arg6: memref<16x128xf32, #tpu.memory_space<vmem>>) attributes {dimension_semantics = [#tpu.dimension_semantics<parallel>], iteration_bounds = array<i64: 1>, scalar_prefetch = 0 : i64, scratch_operands = 0 : i64, tpu.core_type = #tpu.core_type<tc>, window_params = [{transform_indices = @transform_0, window_bounds = array<i64: 16, 128>}, {pipeline_mode = #tpu.pipeline_mode<synchronous>, transform_indices = @transform_1, window_bounds = array<i64: 128, 128>}, {pipeline_mode = #tpu.pipeline_mode<synchronous>, transform_indices = @transform_2, window_bounds = array<i64: 1, 128>}, {pipeline_mode = #tpu.pipeline_mode<synchronous>, transform_indices = @transform_3, window_bounds = array<i64: 128, 128>}, {pipeline_mode = #tpu.pipeline_mode<synchronous>, transform_indices = @transform_4, window_bounds = array<i64: 1, 128>}, {transform_indices = @transform_5, window_bounds = array<i64: 16, 128>}]} {
    %c0 = arith.constant 0 : index
    %c0_0 = arith.constant 0 : index
    %0 = vector.load %arg1[%c0, %c0_0] : memref<16x128xf32, #tpu.memory_space<vmem>>, vector<16x128xf32>
    %c0_1 = arith.constant 0 : index
    %c0_2 = arith.constant 0 : index
    %1 = vector.load %arg2[%c0_1, %c0_2] : memref<128x128xf32, #tpu.memory_space<vmem>>, vector<128x128xf32>
    %cst = arith.constant dense<0.000000e+00> : vector<16x128xf32>
    %2 = tpu.matmul %0, %1, %cst {dimension_numbers = #tpu.dot_dimension_numbers<[1], [0], [0], [1], [0, 0, 1, 1], [], []>} : vector<16x128xf32>, vector<128x128xf32>, vector<16x128xf32> -> vector<16x128xf32>
    %c0_3 = arith.constant 0 : index
    %c0_4 = arith.constant 0 : index
    %3 = vector.load %arg3[%c0_3, %c0_4] : memref<1x128xf32, #tpu.memory_space<vmem>>, vector<1x128xf32>
    %4 = vector.broadcast %3 : vector<1x128xf32> to vector<16x128xf32>
    %5 = arith.addf %2, %4 : vector<16x128xf32>
    %cst_5 = arith.constant 0.000000e+00 : f32
    %6 = vector.broadcast %cst_5 : f32 to vector<16x128xf32>
    %7 = arith.maximumf %5, %6 : vector<16x128xf32>
    %c0_6 = arith.constant 0 : index
    %c0_7 = arith.constant 0 : index
    %8 = vector.load %arg4[%c0_6, %c0_7] : memref<128x128xf32, #tpu.memory_space<vmem>>, vector<128x128xf32>
    %cst_8 = arith.constant dense<0.000000e+00> : vector<16x128xf32>
    %9 = tpu.matmul %7, %8, %cst_8 {dimension_numbers = #tpu.dot_dimension_numbers<[1], [0], [0], [1], [0, 0, 1, 1], [], []>} : vector<16x128xf32>, vector<128x128xf32>, vector<16x128xf32> -> vector<16x128xf32>
    %c0_9 = arith.constant 0 : index
    %c0_10 = arith.constant 0 : index
    %10 = vector.load %arg5[%c0_9, %c0_10] : memref<1x128xf32, #tpu.memory_space<vmem>>, vector<1x128xf32>
    %11 = vector.broadcast %10 : vector<1x128xf32> to vector<16x128xf32>
    %12 = arith.addf %9, %11 : vector<16x128xf32>
    %c0_11 = arith.constant 0 : index
    %c0_12 = arith.constant 0 : index
    %13 = vector.load %arg6[%c0_11, %c0_12] : memref<16x128xf32, #tpu.memory_space<vmem>>, vector<16x128xf32>
    tpu.vector_store %arg6[%c0_11, %c0_12], %12 {strides = array<i32>} : memref<16x128xf32, #tpu.memory_space<vmem>>, vector<16x128xf32>,
    return
  }
  func.func @transform_0(%arg0: i32) -> (i32, i32) {
    %c0_i32 = arith.constant 0 : i32
    %c0_i32_0 = arith.constant 0 : i32
    return %arg0, %c0_i32 : i32, i32
  }
  func.func @transform_1(%arg0: i32) -> (i32, i32) {
    %c0_i32 = arith.constant 0 : i32
    %c0_i32_0 = arith.constant 0 : i32
    %c0_i32_1 = arith.constant 0 : i32
    return %c0_i32, %c0_i32_0 : i32, i32
  }
  func.func @transform_2(%arg0: i32) -> (i32, i32) {
    %c0_i32 = arith.constant 0 : i32
    %c0_i32_0 = arith.constant 0 : i32
    %c0_i32_1 = arith.constant 0 : i32
    return %c0_i32, %c0_i32_0 : i32, i32
  }
  func.func @transform_3(%arg0: i32) -> (i32, i32) {
    %c0_i32 = arith.constant 0 : i32
    %c0_i32_0 = arith.constant 0 : i32
    %c0_i32_1 = arith.constant 0 : i32
    return %c0_i32, %c0_i32_0 : i32, i32
  }
  func.func @transform_4(%arg0: i32) -> (i32, i32) {
    %c0_i32 = arith.constant 0 : i32
    %c0_i32_0 = arith.constant 0 : i32
    %c0_i32_1 = arith.constant 0 : i32
    return %c0_i32, %c0_i32_0 : i32, i32
  }
  func.func @transform_5(%arg0: i32) -> (i32, i32) {
    %c0_i32 = arith.constant 0 : i32
    %c0_i32_0 = arith.constant 0 : i32
    return %arg0, %c0_i32 : i32, i32
  }
}

</mosaic_0001>

<llo_original>
// kernel: tpu_custom_call.1
$region0: #{tpu_custom_call.1}
  #allocation0 [shape = 'u32[]', space=smem, size = 0x4, offset = 0x4, fixed_abs, tag = 'smem constant byte address 0x4 - core index']
  #allocation1 [shape = 'u32[72,128]{1,0:T(1,128)}', space=vmem, size = 0x9000, scoped, tag = 'internal scratch']
  %s0 = inlined_call_operand.hbm [shape: f32[16,128], index: 0, kind: input, shape index: {}]
  %s1 = inlined_call_operand.hbm [shape: f32[128,128], index: 1, kind: input, shape index: {}]
  %s2 = inlined_call_operand.vmem [shape: f32[1,128], index: 2, kind: input, shape index: {}]
  %s3 = inlined_call_operand.hbm [shape: f32[128,128], index: 3, kind: input, shape index: {}]
  %s4 = inlined_call_operand.vmem [shape: f32[1,128], index: 4, kind: input, shape index: {}]
  %s5 = inlined_call_operand.hbm [shape: f32[16,128], index: 5, kind: output, shape index: {}]
  %s6 = sld [smem:[#allocation0]]
  $region42: #{tpu_custom_call.1} parent=0
    _
  %s8 = ssub.s32 1, %s6
  %s9 = scalar_select 0, %s8, %s6
  $region1: #{tpu_custom_call.1} parent=0
    #allocation2 [shape = 'u8[8192]{0}', space=vmem, size = 0x2000, scoped, tag = 'input window, operand 0, single buffered']
    #allocation3 [shape = 's32[1]{0}', space=sflag, size = 0x4, scoped, tag = 'scoped memory for tpu_custom_call.1']
    #allocation4 [shape = 's32[1]{0}', space=sflag, size = 0x4, scoped, tag = 'scoped memory for tpu_custom_call.1']
    #allocation5 [shape = 'u8[65536]{0}', space=vmem, size = 0x10000, scoped, tag = 'input window, operand 1, single buffered']
    #allocation6 [shape = 's32[1]{0}', space=sflag, size = 0x4, scoped, tag = 'scoped memory for tpu_custom_call.1']
    #allocation7 [shape = 'u8[65536]{0}', space=vmem, size = 0x10000, scoped, tag = 'input window, operand 3, single buffered']
    #allocation8 [shape = 'u8[8192]{0}', space=vmem, size = 0x2000, scoped, tag = 'output window, operand 0, single buffered']
    %10 = vsyncpa [#allocation3], 0
    %11 = vsyncpa [#allocation6], 0
    %12 = vsyncpa [#allocation4], 0
    // Predicated region
    $region2: #{tpu_custom_call.1} parent=1 // pred_check
      _
    $region3: #{tpu_custom_call.1} parent=1 // pred_check_branch
      %14 = sbr.rel (0) target = $region5
    $region4: #{tpu_custom_call.1} parent=1 // pred_region
      %16 = vsyncadd [#allocation3], 0
      %s17 = sshll.u32 %s0, 4
      %s18 = int_to_ptr.hbm [resolvable:$true] %s17
      %s19 = sshll.u32 [#allocation2], 4
      %s20 = int_to_ptr.vmem [resolvable:$true] %s19
      %25 = dma.hbm_to_vmem [thread:$0]  %s18, 256, %s20, [#allocation3], 128, 128, 8
    $region5: #{tpu_custom_call.1} parent=1 // pred_fallthru
      _
    // Predicated region
    $region6: #{tpu_custom_call.1} parent=1 // pred_check
      _
    $region7: #{tpu_custom_call.1} parent=1 // pred_check_branch
      %27 = sbr.rel (0) target = $region9
    $region8: #{tpu_custom_call.1} parent=1 // pred_region
      %29 = vsyncadd [#allocation6], 0
      %s30 = sshll.u32 %s1, 4
      %s31 = int_to_ptr.hbm [resolvable:$true] %s30
      %s32 = sshll.u32 [#allocation5], 4
      %s33 = int_to_ptr.vmem [resolvable:$true] %s32
      %38 = dma.hbm_to_vmem [thread:$0]  %s31, 2048, %s33, [#allocation6], 128, 128, 8
    $region9: #{tpu_custom_call.1} parent=1 // pred_fallthru
      _
    // Predicated region
    $region10: #{tpu_custom_call.1} parent=1 // pred_check
      _
    $region11: #{tpu_custom_call.1} parent=1 // pred_check_branch
      %40 = sbr.rel (0) target = $region13
    $region12: #{tpu_custom_call.1} parent=1 // pred_region
      _
    $region13: #{tpu_custom_call.1} parent=1 // pred_fallthru
      _
    // Predicated region
    $region14: #{tpu_custom_call.1} parent=1 // pred_check
      _
    $region15: #{tpu_custom_call.1} parent=1 // pred_check_branch
      %42 = sbr.rel (0) target = $region17
    $region16: #{tpu_custom_call.1} parent=1 // pred_region
      %44 = vsyncadd [#allocation6], 0
      %s45 = sshll.u32 %s3, 4
      %s46 = int_to_ptr.hbm [resolvable:$true] %s45
      %s47 = sshll.u32 [#allocation7], 4
      %s48 = int_to_ptr.vmem [resolvable:$true] %s47
      %53 = dma.hbm_to_vmem [thread:$0]  %s46, 2048, %s48, [#allocation6], 128, 128, 8
    $region17: #{tpu_custom_call.1} parent=1 // pred_fallthru
      _
    // Predicated region
    $region18: #{tpu_custom_call.1} parent=1 // pred_check
      _
    $region19: #{tpu_custom_call.1} parent=1 // pred_check_branch
      %55 = sbr.rel (0) target = $region21
    $region20: #{tpu_custom_call.1} parent=1 // pred_region
      _
    $region21: #{tpu_custom_call.1} parent=1 // pred_fallthru
      _
    // Predicated region
    $region22: #{tpu_custom_call.1} parent=1 // pred_check
      _
    $region23: #{tpu_custom_call.1} parent=1 // pred_check_branch
      %57 = sbr.rel (0) target = $region25
    $region24: #{tpu_custom_call.1} parent=1 // pred_region
      %59 = dma.done [#allocation3], 256
    $region25: #{tpu_custom_call.1} parent=1 // pred_fallthru
      _
    // Predicated region
    $region26: #{tpu_custom_call.1} parent=1 // pred_check
      _
    $region27: #{tpu_custom_call.1} parent=1 // pred_check_branch
      %61 = sbr.rel (0) target = $region29
    $region28: #{tpu_custom_call.1} parent=1 // pred_region
      %63 = dma.done [#allocation6], 2048
    $region29: #{tpu_custom_call.1} parent=1 // pred_fallthru
      _
    // Predicated region
    $region30: #{tpu_custom_call.1} parent=1 // pred_check
      _
    $region31: #{tpu_custom_call.1} parent=1 // pred_check_branch
      %65 = sbr.rel (0) target = $region33
    $region32: #{tpu_custom_call.1} parent=1 // pred_region
      %67 = dma.done [#allocation6], 2048
    $region33: #{tpu_custom_call.1} parent=1 // pred_fallthru
      _
    %v68 = vld [vmem:[#allocation2] sm:$0xff]
    %v69 = vld [vmem:[#allocation2 + $0x8] sm:$0xff]
    %v70 = vld [vmem:[#allocation5] sm:$0xff]
    %v71 = vld [vmem:[#allocation5 + $0x8] sm:$0xff]
    %v72 = vld [vmem:[#allocation5 + $0x10] sm:$0xff]
    %v73 = vld [vmem:[#allocation5 + $0x18] sm:$0xff]
    %v74 = vld [vmem:[#allocation5 + $0x20] sm:$0xff]
    %v75 = vld [vmem:[#allocation5 + $0x28] sm:$0xff]
    %v76 = vld [vmem:[#allocation5 + $0x30] sm:$0xff]
    %v77 = vld [vmem:[#allocation5 + $0x38] sm:$0xff]
    %v78 = vld [vmem:[#allocation5 + $0x40] sm:$0xff]
    %v79 = vld [vmem:[#allocation5 + $0x48] sm:$0xff]
    %v80 = vld [vmem:[#allocation5 + $0x50] sm:$0xff]
    %v81 = vld [vmem:[#allocation5 + $0x58] sm:$0xff]
    %v82 = vld [vmem:[#allocation5 + $0x60] sm:$0xff]
    %v83 = vld [vmem:[#allocation5 + $0x68] sm:$0xff]
    %v84 = vld [vmem:[#allocation5 + $0x70] sm:$0xff]
    %v85 = vld [vmem:[#allocation5 + $0x78] sm:$0xff]
    %v86 = vld [vmem:[%s2] sm:$0x1]
    %v88 = vperm.slane %v86, 0
    %90 = vmatpush.msra.mxu0 %v85
    %91 = vmatpush.msra.mxu0 %v84
    %92 = vmatpush.msra.mxu0 %v83
    %93 = vmatpush.msra.mxu0 %v82
    %94 = vmatpush.msra.mxu0 %v81
    %95 = vmatpush.msra.mxu0 %v80
    %96 = vmatpush.msra.mxu0 %v79
    %97 = vmatpush.msra.mxu0 %v78
    %98 = vmatpush.msra.mxu0 %v77
    %99 = vmatpush.msra.mxu0 %v76
    %100 = vmatpush.msra.mxu0 %v75
    %101 = vmatpush.msra.mxu0 %v74
    %102 = vmatpush.msra.mxu0 %v73
    %103 = vmatpush.msra.mxu0 %v72
    %104 = vmatpush.msra.mxu0 %v71
    %105 = vmatpush.msra.mxu0 %v70
    %106 = vmatmul.f32.gmra.mxu0 %v68
    %v107 = vpop.f32.mrf.mxu0
    %v108 = vadd.f32 %v88, %v107
    %109 = vmatmul.f32.gmra.mxu0 %v69
    %v110 = vpop.f32.mrf.mxu0
    %v111 = vadd.f32 %v88, %v110
    %112 = vdwg.mxu0
    %v113 = vmax.f32 %v108, 0.0
    %v114 = vmax.f32 %v111, 0.0
    %v115 = vld [vmem:[#allocation7] sm:$0xff]
    %v116 = vld [vmem:[#allocation7 + $0x8] sm:$0xff]
    %v117 = vld [vmem:[#allocation7 + $0x10] sm:$0xff]
    %v118 = vld [vmem:[#allocation7 + $0x18] sm:$0xff]
    %v119 = vld [vmem:[#allocation7 + $0x20] sm:$0xff]
    %v120 = vld [vmem:[#allocation7 + $0x28] sm:$0xff]
    %v121 = vld [vmem:[#allocation7 + $0x30] sm:$0xff]
    %v122 = vld [vmem:[#allocation7 + $0x38] sm:$0xff]
    %v123 = vld [vmem:[#allocation7 + $0x40] sm:$0xff]
    %v124 = vld [vmem:[#allocation7 + $0x48] sm:$0xff]
    %v125 = vld [vmem:[#allocation7 + $0x50] sm:$0xff]
    %v126 = vld [vmem:[#allocation7 + $0x58] sm:$0xff]
    %v127 = vld [vmem:[#allocation7 + $0x60] sm:$0xff]
    %v128 = vld [vmem:[#allocation7 + $0x68] sm:$0xff]
    %v129 = vld [vmem:[#allocation7 + $0x70] sm:$0xff]
    %v130 = vld [vmem:[#allocation7 + $0x78] sm:$0xff]
    %v131 = vld [vmem:[%s4] sm:$0x1]
    %v133 = vperm.slane %v131, 0
    %135 = vmatpush.msra.mxu0 %v130
    %136 = vmatpush.msra.mxu0 %v129
    %137 = vmatpush.msra.mxu0 %v128
    %138 = vmatpush.msra.mxu0 %v127
    %139 = vmatpush.msra.mxu0 %v126
    %140 = vmatpush.msra.mxu0 %v125
    %141 = vmatpush.msra.mxu0 %v124
    %142 = vmatpush.msra.mxu0 %v123
    %143 = vmatpush.msra.mxu0 %v122
    %144 = vmatpush.msra.mxu0 %v121
    %145 = vmatpush.msra.mxu0 %v120
    %146 = vmatpush.msra.mxu0 %v119
    %147 = vmatpush.msra.mxu0 %v118
    %148 = vmatpush.msra.mxu0 %v117
    %149 = vmatpush.msra.mxu0 %v116
    %150 = vmatpush.msra.mxu0 %v115
    %151 = vmatmul.f32.gmra.mxu0 %v113
    %v152 = vpop.f32.mrf.mxu0
    %v153 = vadd.f32 %v133, %v152
    %154 = vmatmul.f32.gmra.mxu0 %v114
    %v155 = vpop.f32.mrf.mxu0
    %v156 = vadd.f32 %v133, %v155
    %157 = vdwg.mxu0
    %158 = vst [vmem:[#allocation8] sm:$0xff] %v153
    %159 = vst [vmem:[#allocation8 + $0x8] sm:$0xff] %v156
    // Predicated region
    $region34: #{tpu_custom_call.1} parent=1 // pred_check
      _
    $region35: #{tpu_custom_call.1} parent=1 // pred_check_branch
      %161 = sbr.rel (0) target = $region37
    $region36: #{tpu_custom_call.1} parent=1 // pred_region
      %163 = vsyncadd [#allocation4], 0
      %s164 = sshll.u32 [#allocation8], 4
      %s165 = int_to_ptr.vmem [resolvable:$true] %s164
      %s166 = sshll.u32 %s5, 4
      %s167 = int_to_ptr.hbm [resolvable:$true] %s166
      %172 = dma.vmem_to_hbm [thread:$0]  %s165, 256, %s167, [#allocation4], 128, 128, 8
    $region37: #{tpu_custom_call.1} parent=1 // pred_fallthru
      _
    // Predicated region
    $region38: #{tpu_custom_call.1} parent=1 // pred_check
      _
    $region39: #{tpu_custom_call.1} parent=1 // pred_check_branch
      %174 = sbr.rel (0) target = $region41
    $region40: #{tpu_custom_call.1} parent=1 // pred_region
      %176 = dma.done [#allocation4], 256
    $region41: #{tpu_custom_call.1} parent=1 // pred_fallthru
      _
    %177 = vsyncpa [#allocation3], 1
    %178 = vsyncpa [#allocation6], 1
    %179 = vsyncpa [#allocation4], 1

</llo_original>
